<compile_context>
chip_gen: v6e
topology: v6e:2x2x1
jax: 0.10.0
libtpu: 0.0.40
codegen_flags: <defaults>
</compile_context>

<pallas_src>
import jax
import jax.numpy as jnp
from jax.experimental import pallas as pl
from jax.experimental.pallas import tpu as pltpu

EPS = 1e-6
_LANE = 128
_MiB = 1024 * 1024

_VMEM_CAP_CACHE = None


def _vmem_capacity_bytes():
    """Physical VMEM per TensorCore (cached); conservative fallback = 64 MiB."""
    global _VMEM_CAP_CACHE
    if _VMEM_CAP_CACHE is None:
        try:
            _VMEM_CAP_CACHE = int(pltpu.get_tpu_info().vmem_capacity_bytes)
        except Exception:
            _VMEM_CAP_CACHE = 64 * _MiB
    return _VMEM_CAP_CACHE


def _budgets():
    """(stats_tile_bytes, apply_tile_bytes, vmem_limit_bytes), generation-aware."""
    cap = _vmem_capacity_bytes()
    if cap >= 96 * _MiB:            # v5e / v6e: 128 MiB physical VMEM
        return 6 * _MiB, 6 * _MiB, 64 * _MiB
    # v7x (64 MiB physical) or unknown: apply pipelines ~4x its tile; keep headroom.
    return 6 * _MiB, 4 * _MiB, 48 * _MiB


def _pick_chunk(hw_padded):
    """Lane-chunk for the in-kernel loops: largest of 512/256/128 dividing HWp."""
    for c in (512, 256, 128):
        if hw_padded % c == 0:
            return c
    return hw_padded                # unreachable: hw_padded is a multiple of 128


def _pick_c_block(c, itemsize):
    """Channel block: multiple of the sublane pack granularity dividing C."""
    gran = 8 if itemsize >= 4 else 16
    for blk in (256, 128, 64, 32, 16, 8):
        if blk % gran == 0 and c % blk == 0 and c >= blk:
            return blk
    return c                        # full extent (always a legal BlockSpec dim)


def _pick_hw_tile(hw_padded, c_blk, itemsize, chunk, target_bytes):
    """Largest multiple of `chunk` dividing hw_padded with a ~target_bytes block."""
    max_lanes = max(chunk, (target_bytes // max(1, c_blk * itemsize)) // chunk * chunk)
    t = min(hw_padded, max_lanes)
    t = max(chunk, (t // chunk) * chunk)
    while hw_padded % t != 0:
        t -= chunk
    return t


# ---------------- Pallas kernels ----------------

def _compute_stats(x_flat, hw_true, c_blk, t_hw, chunk, vmem_limit):
    """Per-(b, c) spatial mean / std of x_flat (B, C, HWp) -> two (B, C, 1) f32.

    Single pass: sum and sum-of-squares accumulate into (c_blk, chunk) f32 VMEM
    scratch with VPU adds only; one cross-lane (XLU) reduce per (b, c-block)
    happens in the finalize step.  Zero padding of the spatial axis is neutral
    because the divisor is the true HW.
    """
    B, C, HWp = x_flat.shape
    n_c, n_hw = C // c_blk, HWp // t_hw
    n_chunks = t_hw // chunk
    inv_hw = 1.0 / float(hw_true)

    def stats_kernel(x_ref, mu_ref, sig_ref, sum_acc, sq_acc):
        hw = pl.program_id(2)

        @pl.when(hw == 0)
        def _():
            sum_acc[...] = jnp.zeros_like(sum_acc)
            sq_acc[...] = jnp.zeros_like(sq_acc)

        def body(j, carry):
            off = pl.multiple_of(j * chunk, _LANE)
            xc = x_ref[0, :, pl.ds(off, chunk)].astype(jnp.float32)   # (c_blk, chunk)
            sum_acc[...] += xc
            sq_acc[...] += xc * xc
            return carry

        jax.lax.fori_loop(0, n_chunks, body, 0, unroll=(n_chunks <= 16))

        @pl.when(hw == pl.num_programs(2) - 1)
        def _():
            s = jnp.sum(sum_acc[...], axis=-1, keepdims=True)         # (c_blk, 1)
            sq = jnp.sum(sq_acc[...], axis=-1, keepdims=True)
            mean = s * inv_hw
            # Population variance (np.var default, as in the reference module);
            # clamp >= 0 against cancellation on near-constant channels.
            var = jnp.maximum(sq * inv_hw - mean * mean, 0.0)
            mu_ref[0] = mean
            sig_ref[0] = jnp.sqrt(var + EPS)

    stat_spec = pl.BlockSpec((1, c_blk, 1), lambda b, c, h: (b, c, 0))
    return pl.pallas_call(
        stats_kernel,
        out_shape=(jax.ShapeDtypeStruct((B, C, 1), jnp.float32),
                   jax.ShapeDtypeStruct((B, C, 1), jnp.float32)),
        grid=(B, n_c, n_hw),
        in_specs=[pl.BlockSpec((1, c_blk, t_hw), lambda b, c, h: (b, c, h))],
        out_specs=(stat_spec, stat_spec),
        scratch_shapes=[pltpu.VMEM((c_blk, chunk), jnp.float32),
                        pltpu.VMEM((c_blk, chunk), jnp.float32)],
        compiler_params=pltpu.CompilerParams(
            dimension_semantics=("parallel", "parallel", "arbitrary"),
            vmem_limit_bytes=vmem_limit),
    )(x_flat)


def _apply_mix(x_flat, gb, c_blk, t_hw, chunk, vmem_limit):
    """y = x * gamma + beta with gamma/beta packed as gb (B, C, 2) f32."""
    B, C, HWp = x_flat.shape
    n_c, n_hw = C // c_blk, HWp // t_hw
    n_chunks = t_hw // chunk

    def apply_kernel(x_ref, gb_ref, o_ref):
        g = gb_ref[0, :, 0:1]                  # (c_blk, 1) gamma (lane-broadcasts)
        bta = gb_ref[0, :, 1:2]                # (c_blk, 1) beta

        def body(j, carry):
            off = pl.multiple_of(j * chunk, _LANE)
            xc = x_ref[0, :, pl.ds(off, chunk)].astype(jnp.float32)
            o_ref[0, :, pl.ds(off, chunk)] = (xc * g + bta).astype(o_ref.dtype)
            return carry

        jax.lax.fori_loop(0, n_chunks, body, 0, unroll=(n_chunks <= 16))

    x_spec = pl.BlockSpec((1, c_blk, t_hw), lambda b, c, h: (b, c, h))
    return pl.pallas_call(
        apply_kernel,
        out_shape=jax.ShapeDtypeStruct((B, C, HWp), x_flat.dtype),
        grid=(B, n_c, n_hw),
        in_specs=[x_spec,
                  pl.BlockSpec((1, c_blk, 2), lambda b, c, h: (b, c, 0))],
        out_specs=x_spec,
        compiler_params=pltpu.CompilerParams(
            dimension_semantics=("parallel", "parallel", "parallel"),
            vmem_limit_bytes=vmem_limit),
    )(x_flat, gb)


# ---------------- MixStyle wrapper ----------------

def mixstyle(x, key, p=0.5, alpha=0.1, mix="random",
             training=True, activated=True):
    """MixStyle forward. x: (B, C, H, W), any float dtype. Jittable."""
    if not training or not activated:
        return x

    k_gate, k_beta, k_perm = jax.random.split(key, 3)
    B, C, H, W = x.shape
    HW = H * W

    def _mix_branch(x):
        x_flat = x.reshape(B, C, HW)
        # Pad the flattened spatial axis to a lane multiple: zeros are neutral
        # for sum / sum-of-squares, and the padded apply columns are sliced off.
        hw_pad = (-HW) % _LANE
        if hw_pad:
            x_flat = jnp.pad(x_flat, ((0, 0), (0, 0), (0, hw_pad)))
        HWp = HW + hw_pad

        itemsize = x_flat.dtype.itemsize
        stats_target, apply_target, vmem_limit = _budgets()
        chunk = _pick_chunk(HWp)
        c_blk = _pick_c_block(C, itemsize)
        t_stats = _pick_hw_tile(HWp, c_blk, itemsize, chunk, stats_target)
        t_apply = _pick_hw_tile(HWp, c_blk, itemsize, chunk, apply_target)

        # Kernel 1: per-(b, c) spatial mean / std, native (B, C, 1) layout.
        mu, sig = _compute_stats(x_flat, HW, c_blk, t_stats, chunk, vmem_limit)

        # lambda ~ Beta(alpha, alpha), shape (B, 1, 1) -- broadcasts over C.
        lmda = jax.random.beta(k_beta, alpha, alpha, shape=(B, 1, 1)).astype(jnp.float32)

        if mix == "random":
            perm = jax.random.permutation(k_perm, B)
        elif mix == "crossdomain":
            perm = jnp.arange(B - 1, -1, -1)
            perm_b, perm_a = perm[: B // 2], perm[B // 2:]
            k1, k2 = jax.random.split(k_perm)
            perm_b = perm_b[jax.random.permutation(k1, perm_b.shape[0])]
            perm_a = perm_a[jax.random.permutation(k2, perm_a.shape[0])]
            perm = jnp.concatenate([perm_b, perm_a], axis=0)
        else:
            raise NotImplementedError(mix)

        mu2, sig2 = mu[perm], sig[perm]
        mu_mix = mu * lmda + mu2 * (1.0 - lmda)
        sig_mix = sig * lmda + sig2 * (1.0 - lmda)

        # Fold normalize + restyle into one affine (tiny (B, C)-sized glue):
        #   y = (x - mu)/sig * sig_mix + mu_mix = x * gamma + beta
        gamma = sig_mix / sig                              # (B, C, 1) f32
        beta = mu_mix - mu * gamma                         # (B, C, 1) f32
        gb = jnp.concatenate([gamma, beta], axis=-1)       # (B, C, 2) f32

        # Kernel 2: single fused multiply-add streamed over x.
        out_flat = _apply_mix(x_flat, gb, c_blk, t_apply, chunk, vmem_limit)
        if hw_pad:
            out_flat = out_flat[:, :, :HW]
        return out_flat.reshape(B, C, H, W)

    # Stochastic gate as a traced cond (random.random() > p -> identity).
    gate = jax.random.uniform(k_gate) <= p
    return jax.lax.cond(gate, _mix_branch, lambda x: x, x)


# ---------------- demo / self-check ----------------

def _reference_mixstyle(x, key, alpha=0.1):
    """Pure-JAX reference with the same lambda / perm draws as mixstyle()."""
    B = x.shape[0]
    _, k_beta, k_perm = jax.random.split(key, 3)
    xf = x.astype(jnp.float32)
    mu = jnp.mean(xf, axis=(2, 3), keepdims=True)
    var = jnp.var(xf, axis=(2, 3), keepdims=True)
    sig = jnp.sqrt(var + EPS)
    x_normed = (xf - mu) / sig
    lmda = jax.random.beta(k_beta, alpha, alpha, shape=(B, 1, 1)).astype(jnp.float32)
    lmda = lmda[..., None]                                 # (B, 1, 1, 1)
    perm = jax.random.permutation(k_perm, B)
    mu_mix = mu * lmda + mu[perm] * (1.0 - lmda)
    sig_mix = sig * lmda + sig[perm] * (1.0 - lmda)
    return (x_normed * sig_mix + mu_mix).astype(x.dtype)


if __name__ == "__main__":
    key = jax.random.PRNGKey(0)
    kx, kms, kx2, kms2 = jax.random.split(key, 4)

    mixstyle_jit = jax.jit(mixstyle, static_argnames=("mix", "training", "activated"))

    # --- main path: lane-aligned spatial size (16*16 = 256) ---
    B, C, H, W = 2, 4, 16, 16
    x = jax.random.normal(kx, (B, C, H, W), dtype=jnp.float32) * 2.0 + 0.5

    out = jax.block_until_ready(mixstyle_jit(x, kms, p=1.0, alpha=0.1, mix="random"))
    assert out.shape == x.shape and out.dtype == x.dtype
    ref = _reference_mixstyle(x, kms, alpha=0.1)
    assert jnp.allclose(out, ref, atol=1e-3, rtol=1e-3), "mismatch vs reference"

    # --- padded path: HW = 14*14 = 196 is not a lane multiple ---
    B2, C2, H2, W2 = 2, 8, 14, 14
    x2 = jax.random.normal(kx2, (B2, C2, H2, W2), dtype=jnp.float32) * 1.5 - 0.3
    out2 = jax.block_until_ready(mixstyle_jit(x2, kms2, p=1.0, alpha=0.1, mix="random"))
    ref2 = _reference_mixstyle(x2, kms2, alpha=0.1)
    assert out2.shape == x2.shape and out2.dtype == x2.dtype
    assert jnp.allclose(out2, ref2, atol=1e-3, rtol=1e-3), "mismatch vs reference (padded HW)"

    # --- bf16 in, bf16 out (native-dtype streaming, f32 stat accumulation) ---
    out_bf16 = jax.block_until_ready(
        mixstyle_jit(x.astype(jnp.bfloat16), kms, p=1.0, alpha=0.1, mix="random"))
    assert out_bf16.shape == x.shape and out_bf16.dtype == jnp.bfloat16
    assert bool(jnp.all(jnp.isfinite(out_bf16.astype(jnp.float32))))

    # --- crossdomain mixing branch ---
    out_cd = jax.block_until_ready(
        mixstyle_jit(x, kms, p=1.0, alpha=0.1, mix="crossdomain"))
    assert out_cd.shape == x.shape

    # --- gate off (p=0.0) and eval mode return x unchanged ---
    out_off = jax.block_until_ready(mixstyle_jit(x, kms, p=0.0, alpha=0.1, mix="random"))
    assert jnp.array_equal(out_off, x)
    assert mixstyle(x, kms, training=False) is x

    print("KERNEL_OK")
</pallas_src>

<mosaic_0001>
module attributes {stable_mosaic.version = 11 : i64} {
  func.func @stats_kernel(%arg0: i32, %arg1: i32, %arg2: i32, %arg3: memref<1x4x256xf32, #tpu.memory_space<vmem>>, %arg4: memref<1x4x1xf32, #tpu.memory_space<vmem>>, %arg5: memref<1x4x1xf32, #tpu.memory_space<vmem>>, %arg6: memref<4x256xf32, #tpu.memory_space<vmem>>, %arg7: memref<4x256xf32, #tpu.memory_space<vmem>>) attributes {dimension_semantics = [#tpu.dimension_semantics<parallel>, #tpu.dimension_semantics<parallel>, #tpu.dimension_semantics<arbitrary>], iteration_bounds = array<i64: 2, 1, 1>, scalar_prefetch = 0 : i64, scratch_operands = 2 : i64, tpu.core_type = #tpu.core_type<tc>, window_params = [{transform_indices = @transform_0, window_bounds = array<i64: 1, 4, 256>}, {transform_indices = @transform_1, window_bounds = array<i64: 1, 4, 1>}, {transform_indices = @transform_2, window_bounds = array<i64: 1, 4, 1>}]} {
    %c0_i32 = arith.constant 0 : i32
    %0 = arith.cmpi eq, %arg2, %c0_i32 : i32
    %1 = arith.extui %0 : i1 to i32
    %c0_i32_0 = arith.constant 0 : i32
    %2 = arith.cmpi ne, %1, %c0_i32_0 : i32
    scf.if %2 {
      %cst = arith.constant 0.000000e+00 : f32
      %18 = vector.broadcast %cst : f32 to vector<4x256xf32>
      %c0_13 = arith.constant 0 : index
      %c0_14 = arith.constant 0 : index
      %19 = vector.load %arg6[%c0_13, %c0_14] : memref<4x256xf32, #tpu.memory_space<vmem>>, vector<4x256xf32>
      tpu.vector_store %arg6[%c0_13, %c0_14], %18 {strides = array<i32>} : memref<4x256xf32, #tpu.memory_space<vmem>>, vector<4x256xf32>,
      %cst_15 = arith.constant 0.000000e+00 : f32
      %20 = vector.broadcast %cst_15 : f32 to vector<4x256xf32>
      %c0_16 = arith.constant 0 : index
      %c0_17 = arith.constant 0 : index
      %21 = vector.load %arg7[%c0_16, %c0_17] : memref<4x256xf32, #tpu.memory_space<vmem>>, vector<4x256xf32>
      tpu.vector_store %arg7[%c0_16, %c0_17], %20 {strides = array<i32>} : memref<4x256xf32, #tpu.memory_space<vmem>>, vector<4x256xf32>,
    } else {
    }
    %c0_i32_1 = arith.constant 0 : i32
    %c256_i32 = arith.constant 256 : i32
    %3 = arith.muli %c0_i32_1, %c256_i32 : i32
    %4 = tpu.assume_multiple %3, 128 : i32
    %c0 = arith.constant 0 : index
    %c0_2 = arith.constant 0 : index
    %5 = arith.index_cast %4 : i32 to index
    %6 = vector.load %arg3[%c0, %c0_2, %5] : memref<1x4x256xf32, #tpu.memory_space<vmem>>, vector<1x4x256xf32>
    %7 = vector.shape_cast %6 : vector<1x4x256xf32> to vector<4x256xf32>
    %c0_3 = arith.constant 0 : index
    %c0_4 = arith.constant 0 : index
    %8 = vector.load %arg6[%c0_3, %c0_4] : memref<4x256xf32, #tpu.memory_space<vmem>>, vector<4x256xf32>
    %9 = arith.addf %8, %7 : vector<4x256xf32>
    %c0_5 = arith.constant 0 : index
    %c0_6 = arith.constant 0 : index
    %10 = vector.load %arg6[%c0_5, %c0_6] : memref<4x256xf32, #tpu.memory_space<vmem>>, vector<4x256xf32>
    tpu.vector_store %arg6[%c0_5, %c0_6], %9 {strides = array<i32>} : memref<4x256xf32, #tpu.memory_space<vmem>>, vector<4x256xf32>,
    %c0_7 = arith.constant 0 : index
    %c0_8 = arith.constant 0 : index
    %11 = vector.load %arg7[%c0_7, %c0_8] : memref<4x256xf32, #tpu.memory_space<vmem>>, vector<4x256xf32>
    %12 = arith.mulf %7, %7 : vector<4x256xf32>
    %13 = arith.addf %11, %12 : vector<4x256xf32>
    %c0_9 = arith.constant 0 : index
    %c0_10 = arith.constant 0 : index
    %14 = vector.load %arg7[%c0_9, %c0_10] : memref<4x256xf32, #tpu.memory_space<vmem>>, vector<4x256xf32>
    tpu.vector_store %arg7[%c0_9, %c0_10], %13 {strides = array<i32>} : memref<4x256xf32, #tpu.memory_space<vmem>>, vector<4x256xf32>,
    %c1_i32 = arith.constant 1 : i32
    %c0_i32_11 = arith.constant 0 : i32
    %15 = arith.cmpi eq, %arg2, %c0_i32_11 : i32
    %16 = arith.extui %15 : i1 to i32
    %c0_i32_12 = arith.constant 0 : i32
    %17 = arith.cmpi ne, %16, %c0_i32_12 : i32
    scf.if %17 {
      %c0_13 = arith.constant 0 : index
      %c0_14 = arith.constant 0 : index
      %18 = vector.load %arg6[%c0_13, %c0_14] : memref<4x256xf32, #tpu.memory_space<vmem>>, vector<4x256xf32>
      %cst = arith.constant dense<0.000000e+00> : vector<4xf32>
      %19 = vector.multi_reduction <add>, %18, %cst [1] : vector<4x256xf32> to vector<4xf32>
      %20 = vector.shape_cast %19 : vector<4xf32> to vector<4x1xf32>
      %c0_15 = arith.constant 0 : index
      %c0_16 = arith.constant 0 : index
      %21 = vector.load %arg7[%c0_15, %c0_16] : memref<4x256xf32, #tpu.memory_space<vmem>>, vector<4x256xf32>
      %cst_17 = arith.constant dense<0.000000e+00> : vector<4xf32>
      %22 = vector.multi_reduction <add>, %21, %cst_17 [1] : vector<4x256xf32> to vector<4xf32>
      %23 = vector.shape_cast %22 : vector<4xf32> to vector<4x1xf32>
      %cst_18 = arith.constant 3.906250e-03 : f32
      %24 = vector.broadcast %cst_18 : f32 to vector<4x1xf32>
      %25 = arith.mulf %20, %24 : vector<4x1xf32>
      %cst_19 = arith.constant 3.906250e-03 : f32
      %26 = vector.broadcast %cst_19 : f32 to vector<4x1xf32>
      %27 = arith.mulf %23, %26 : vector<4x1xf32>
      %28 = arith.mulf %25, %25 : vector<4x1xf32>
      %29 = arith.subf %27, %28 : vector<4x1xf32>
      %cst_20 = arith.constant 0.000000e+00 : f32
      %30 = vector.broadcast %cst_20 : f32 to vector<4x1xf32>
      %31 = arith.maximumf %29, %30 : vector<4x1xf32>
      %c0_21 = arith.constant 0 : index
      %c0_22 = arith.constant 0 : index
      %c0_23 = arith.constant 0 : index
      %32 = vector.load %arg4[%c0_21, %c0_22, %c0_23] : memref<1x4x1xf32, #tpu.memory_space<vmem>>, vector<1x4x1xf32>
      %33 = vector.shape_cast %32 : vector<1x4x1xf32> to vector<4x1xf32>
      %34 = vector.shape_cast %25 : vector<4x1xf32> to vector<1x4x1xf32>
      tpu.vector_store %arg4[%c0_21, %c0_22, %c0_23], %34 {strides = array<i32>} : memref<1x4x1xf32, #tpu.memory_space<vmem>>, vector<1x4x1xf32>,
      %cst_24 = arith.constant 9.99999997E-7 : f32
      %35 = vector.broadcast %cst_24 : f32 to vector<4x1xf32>
      %36 = arith.addf %31, %35 : vector<4x1xf32>
      %37 = math.sqrt %36 : vector<4x1xf32>
      %c0_25 = arith.constant 0 : index
      %c0_26 = arith.constant 0 : index
      %c0_27 = arith.constant 0 : index
      %38 = vector.load %arg5[%c0_25, %c0_26, %c0_27] : memref<1x4x1xf32, #tpu.memory_space<vmem>>, vector<1x4x1xf32>
      %39 = vector.shape_cast %38 : vector<1x4x1xf32> to vector<4x1xf32>
      %40 = vector.shape_cast %37 : vector<4x1xf32> to vector<1x4x1xf32>
      tpu.vector_store %arg5[%c0_25, %c0_26, %c0_27], %40 {strides = array<i32>} : memref<1x4x1xf32, #tpu.memory_space<vmem>>, vector<1x4x1xf32>,
    } else {
    }
    return
  }
  func.func @transform_0(%arg0: i32, %arg1: i32, %arg2: i32) -> (i32, i32, i32) {
    %c0_i32 = arith.constant 0 : i32
    return %arg0, %arg1, %arg2 : i32, i32, i32
  }
  func.func @transform_1(%arg0: i32, %arg1: i32, %arg2: i32) -> (i32, i32, i32) {
    %c0_i32 = arith.constant 0 : i32
    %c0_i32_0 = arith.constant 0 : i32
    return %arg0, %arg1, %c0_i32 : i32, i32, i32
  }
  func.func @transform_2(%arg0: i32, %arg1: i32, %arg2: i32) -> (i32, i32, i32) {
    %c0_i32 = arith.constant 0 : i32
    %c0_i32_0 = arith.constant 0 : i32
    return %arg0, %arg1, %c0_i32 : i32, i32, i32
  }
}

module attributes {stable_mosaic.version = 11 : i64} {
  func.func @apply_kernel(%arg0: i32, %arg1: i32, %arg2: i32, %arg3: memref<1x4x256xf32, #tpu.memory_space<vmem>>, %arg4: memref<1x4x2xf32, #tpu.memory_space<vmem>>, %arg5: memref<1x4x256xf32, #tpu.memory_space<vmem>>) attributes {dimension_semantics = [#tpu.dimension_semantics<parallel>, #tpu.dimension_semantics<parallel>, #tpu.dimension_semantics<parallel>], iteration_bounds = array<i64: 2, 1, 1>, scalar_prefetch = 0 : i64, scratch_operands = 0 : i64, tpu.core_type = #tpu.core_type<tc>, window_params = [{transform_indices = @transform_0, window_bounds = array<i64: 1, 4, 256>}, {transform_indices = @transform_1, window_bounds = array<i64: 1, 4, 2>}, {transform_indices = @transform_2, window_bounds = array<i64: 1, 4, 256>}]} {
    %c0 = arith.constant 0 : index
    %c0_0 = arith.constant 0 : index
    %c0_1 = arith.constant 0 : index
    %0 = vector.load %arg4[%c0, %c0_0, %c0_1] : memref<1x4x2xf32, #tpu.memory_space<vmem>>, vector<1x4x1xf32>
    %1 = vector.shape_cast %0 : vector<1x4x1xf32> to vector<4x1xf32>
    %c0_2 = arith.constant 0 : index
    %c0_3 = arith.constant 0 : index
    %c1 = arith.constant 1 : index
    %2 = vector.load %arg4[%c0_2, %c0_3, %c1] : memref<1x4x2xf32, #tpu.memory_space<vmem>>, vector<1x4x1xf32>
    %3 = vector.shape_cast %2 : vector<1x4x1xf32> to vector<4x1xf32>
    %c0_i32 = arith.constant 0 : i32
    %c256_i32 = arith.constant 256 : i32
    %4 = arith.muli %c0_i32, %c256_i32 : i32
    %5 = tpu.assume_multiple %4, 128 : i32
    %c0_4 = arith.constant 0 : index
    %c0_5 = arith.constant 0 : index
    %6 = arith.index_cast %5 : i32 to index
    %7 = vector.load %arg3[%c0_4, %c0_5, %6] : memref<1x4x256xf32, #tpu.memory_space<vmem>>, vector<1x4x256xf32>
    %8 = vector.shape_cast %7 : vector<1x4x256xf32> to vector<4x256xf32>
    %9 = vector.broadcast %1 : vector<4x1xf32> to vector<4x256xf32>
    %10 = arith.mulf %8, %9 : vector<4x256xf32>
    %11 = vector.broadcast %3 : vector<4x1xf32> to vector<4x256xf32>
    %12 = arith.addf %10, %11 : vector<4x256xf32>
    %c0_6 = arith.constant 0 : index
    %c0_7 = arith.constant 0 : index
    %13 = arith.index_cast %5 : i32 to index
    %14 = vector.load %arg5[%c0_6, %c0_7, %13] : memref<1x4x256xf32, #tpu.memory_space<vmem>>, vector<1x4x256xf32>
    %15 = vector.shape_cast %14 : vector<1x4x256xf32> to vector<4x256xf32>
    %16 = vector.shape_cast %12 : vector<4x256xf32> to vector<1x4x256xf32>
    tpu.vector_store %arg5[%c0_6, %c0_7, %13], %16 {strides = array<i32>} : memref<1x4x256xf32, #tpu.memory_space<vmem>>, vector<1x4x256xf32>,
    %c1_i32 = arith.constant 1 : i32
    return
  }
  func.func @transform_0(%arg0: i32, %arg1: i32, %arg2: i32) -> (i32, i32, i32) {
    %c0_i32 = arith.constant 0 : i32
    return %arg0, %arg1, %arg2 : i32, i32, i32
  }
  func.func @transform_1(%arg0: i32, %arg1: i32, %arg2: i32) -> (i32, i32, i32) {
    %c0_i32 = arith.constant 0 : i32
    %c0_i32_0 = arith.constant 0 : i32
    return %arg0, %arg1, %c0_i32 : i32, i32, i32
  }
  func.func @transform_2(%arg0: i32, %arg1: i32, %arg2: i32) -> (i32, i32, i32) {
    %c0_i32 = arith.constant 0 : i32
    return %arg0, %arg1, %arg2 : i32, i32, i32
  }
}

</mosaic_0001>

<llo_original>
// kernel: branch_1_fun.3
$region0: #{branch_1_fun.3}
  #allocation0 [shape = 'u32[]', space=smem, size = 0x4, offset = 0x4, fixed_abs, tag = 'smem constant byte address 0x4 - core index']
  #allocation1 [shape = 'u32[144,128]{1,0:T(1,128)}', space=vmem, size = 0x12000, scoped, tag = 'internal scratch']
  %s0 = inlined_call_operand.vmem [shape: f32[2,4,256], index: 0, kind: input, shape index: {}]
  %s1 = inlined_call_operand.vmem [shape: f32[2,4,2], index: 1, kind: input, shape index: {}]
  %s2 = inlined_call_operand.vmem [shape: f32[2,4,256], index: 2, kind: output, shape index: {}]
  %s3 = sld [smem:[#allocation0]]
  $region41: #{branch_1_fun.3} parent=0
    _
  %s5 = ssub.s32 1, %s3
  %s6 = scalar_select 0, %s5, %s3
  loop: start=0, step=1, limit=4
  $region2: #{branch_1_fun.3} parent=0 // loop_pre_header
    _
  $region3: #{branch_1_fun.3} parent=0 // loop_header
    %s8 = sphi 0, %s12
    %p9 = scmp.ge.s32.totalorder %s8, 4
    %s15 = sphi 0, %s34
    %s16 = sphi 0, %s30
    %s17 = sphi 0, %s26
    %s18 = sphi 0, %s15
    %s19 = sphi 0, %s16
    %s20 = sphi 0, %s17
    %s21 = sphi 0, %s18
    %s22 = sphi 0, %s19
    %s23 = sphi 0, %s20
    %s41 = sphi 0, %s43
    %s44 = sphi 0, %s41
    %s45 = sphi 0, %s44
    %s61 = sphi 0, %s45
    %s69 = sphi 0, %s71
    %s72 = sphi 0, %s69
    %s73 = sphi 0, %s72
    %s89 = sphi 0, %s73
    %s99 = sphi 0, %s101
    %s102 = sphi 0, %s99
    %s103 = sphi 0, %s102
    %s119 = sphi 0, %s103
  $region4: #{branch_1_fun.3} parent=0 // loop_header_branch
    %11 = sbr.rel (%p9) target = $region8
  $region5: #{branch_1_fun.3} parent=0 // loop_body
    %s13 = ssub.s32 %s8, 1
    %s14 = ssub.s32 %s8, 2
    %s24 = sadd.s32 1, %s17
    %p25 = scmp.ge.s32.totalorder %s24, 1
    %s26 = scalar_select %p25, 0, %s24
    %s27 = sadd.s32 1, %s16
    %s28 = scalar_select %p25, %s27, %s16
    %p29 = scmp.ge.s32.totalorder %s28, 1
    %s30 = scalar_select %p29, 0, %s28
    %s31 = sadd.s32 1, %s15
    %s32 = scalar_select %p29, %s31, %s15
    %p33 = scmp.ge.s32.totalorder %s32, 2
    %s34 = scalar_select %p33, 0, %s32
    %s35 = ssub.s32 %s15, %s34
    %s36 = ssub.s32 %s16, %s30
    %s37 = sor.u32 %s35, %s36
    %s38 = ssub.s32 %s17, %s26
    %s39 = sor.u32 %s37, %s38
    %p40 = scmp.eq.s32.totalorder %s39, 0
    %s42 = sadd.s32 %s41, 1
    %s43 = scalar_select %p40, %s41, %s42
    %p46 = pneg %p40
    %p47 = scmp.eq.s32.totalorder %s8, 1
    %p48 = por %p46, %p47
    %p49 = scmp.ne.s32.totalorder %s41, %s44
    %p50 = scmp.eq.s32.totalorder %s8, 0
    %p51 = por %p49, %p50
    %p52 = scmp.ne.s32.totalorder %s41, %s44
    %p53 = scmp.eq.s32.totalorder %s13, 1
    %p54 = por %p52, %p53
    %p55 = scmp.ne.s32.totalorder %s44, %s45
    %p56 = scmp.eq.s32.totalorder %s13, 0
    %p57 = por %p55, %p56
    %p58 = scmp.ne.s32.totalorder %s44, %s45
    %p59 = scmp.eq.s32.totalorder %s14, 1
    %p60 = por %p58, %p59
    %p62 = scmp.ne.s32.totalorder %s45, %s61
    %p63 = scmp.eq.s32.totalorder %s14, 0
    %p64 = por %p62, %p63
    %s65 = ssub.s32 %s15, %s34
    %s66 = ssub.s32 %s16, %s30
    %s67 = sor.u32 %s65, %s66
    %p68 = scmp.eq.s32.totalorder %s67, 0
    %s70 = sadd.s32 %s69, 1
    %s71 = scalar_select %p68, %s69, %s70
    %p74 = pneg %p68
    %p75 = scmp.eq.s32.totalorder %s8, 1
    %p76 = por %p74, %p75
    %p77 = scmp.ne.s32.totalorder %s69, %s72
    %p78 = scmp.eq.s32.totalorder %s8, 0
    %p79 = por %p77, %p78
    %p80 = scmp.ne.s32.totalorder %s69, %s72
    %p81 = scmp.eq.s32.totalorder %s13, 1
    %p82 = por %p80, %p81
    %p83 = scmp.ne.s32.totalorder %s72, %s73
    %p84 = scmp.eq.s32.totalorder %s13, 0
    %p85 = por %p83, %p84
    %p86 = scmp.ne.s32.totalorder %s72, %s73
    %p87 = scmp.eq.s32.totalorder %s14, 1
    %p88 = por %p86, %p87
    %p90 = scmp.ne.s32.totalorder %s73, %s89
    %p91 = scmp.eq.s32.totalorder %s14, 0
    %p92 = por %p90, %p91
    %s93 = ssub.s32 %s15, %s34
    %s94 = ssub.s32 %s16, %s30
    %s95 = sor.u32 %s93, %s94
    %s96 = ssub.s32 %s17, %s26
    %s97 = sor.u32 %s95, %s96
    %p98 = scmp.eq.s32.totalorder %s97, 0
    %s100 = sadd.s32 %s99, 1
    %s101 = scalar_select %p98, %s99, %s100
    %p104 = pneg %p98
    %p105 = scmp.eq.s32.totalorder %s8, 1
    %p106 = por %p104, %p105
    %p107 = scmp.ne.s32.totalorder %s99, %s102
    %p108 = scmp.eq.s32.totalorder %s8, 0
    %p109 = por %p107, %p108
    %p110 = scmp.ne.s32.totalorder %s99, %s102
    %p111 = scmp.eq.s32.totalorder %s13, 1
    %p112 = por %p110, %p111
    %p113 = scmp.ne.s32.totalorder %s102, %s103
    %p114 = scmp.eq.s32.totalorder %s13, 0
    %p115 = por %p113, %p114
    %p116 = scmp.ne.s32.totalorder %s102, %s103
    %p117 = scmp.eq.s32.totalorder %s14, 1
    %p118 = por %p116, %p117
    %p120 = scmp.ne.s32.totalorder %s103, %s119
    %p121 = scmp.eq.s32.totalorder %s14, 0
    %p122 = por %p120, %p121
    %p123 = scmp.le.s32.totalorder 1, %s8
    %p124 = scmp.lt.s32.totalorder %s8, 3
    %p125 = pnand %p123, %p124
    %p126 = pneg %p125
    // Predicated region
    $region9: #{branch_1_fun.3} parent=5 // pred_check
      _
    $region10: #{branch_1_fun.3} parent=5 // pred_check_branch
      %128 = sbr.rel (%p125) target = $region12
    $region11: #{branch_1_fun.3} parent=5 // pred_region
      %s129 = ssub.s32 %s8, 1
    $region12: #{branch_1_fun.3} parent=5 // pred_fallthru
      _
    %p130 = scmp.lt.s32.totalorder %s8, 2
    // Predicated region
    $region13: #{branch_1_fun.3} parent=5 // pred_check
      %p131 = pneg %p130
    $region14: #{branch_1_fun.3} parent=5 // pred_check_branch
      %133 = sbr.rel (%p131) target = $region16
    $region15: #{branch_1_fun.3} parent=5 // pred_region
      // Predicated region
      $region17: #{branch_1_fun.3} parent=15 // pred_check
        %p134 = pneg %p51
      $region18: #{branch_1_fun.3} parent=15 // pred_check_branch
        %136 = sbr.rel (%p134) target = $region20
      $region19: #{branch_1_fun.3} parent=15 // pred_region
        %s137 = smul.u32 2, %s17
        %p138 = scmp.lt.s32.totalorder %s15, 1
        %s139 = scalar_select %p138, %s15, 1
        %p140 = scmp.lt.s32.totalorder %s16, 0
        %s141 = scalar_select %p140, %s16, 0
        %p142 = scmp.lt.s32.totalorder %s137, 1
        %s143 = scalar_select %p142, %s137, 1
        %s144 = smul.addr %s141, 2
        %s145 = sadd.s32 %s143, %s144
        %s146 = smul.addr %s139, 2
        %s147 = sadd.s32 %s145, %s146
        %s148 = smul.addr %s147, 4
        %s149 = scalar_lea.vmem %s0, %s148
        %s150 = smul.u32 2, %s17
      $region20: #{branch_1_fun.3} parent=15 // pred_fallthru
        _
      // Predicated region
      $region21: #{branch_1_fun.3} parent=15 // pred_check
        %p151 = pneg %p79
      $region22: #{branch_1_fun.3} parent=15 // pred_check_branch
        %153 = sbr.rel (%p151) target = $region24
      $region23: #{branch_1_fun.3} parent=15 // pred_region
        %p154 = scmp.lt.s32.totalorder %s15, 1
        %s155 = scalar_select %p154, %s15, 1
        %p156 = scmp.lt.s32.totalorder %s16, 0
        %s157 = scalar_select %p156, %s16, 0
        %s158 = sadd.s32 %s157, %s155
        %s159 = smul.addr %s158, 4
        %s160 = scalar_lea.vmem %s1, %s159
      $region24: #{branch_1_fun.3} parent=15 // pred_fallthru
        _
    $region16: #{branch_1_fun.3} parent=5 // pred_fallthru
      _
    %p161 = scmp.le.s32.totalorder 1, %s8
    %p162 = scmp.lt.s32.totalorder %s8, 3
    %p163 = pnand %p161, %p162
    %p164 = pneg %p163
    // Predicated region
    $region25: #{branch_1_fun.3} parent=5 // pred_check
      _
    $region26: #{branch_1_fun.3} parent=5 // pred_check_branch
      %166 = sbr.rel (%p163) target = $region28
    $region27: #{branch_1_fun.3} parent=5 // pred_region
      %s167 = ssub.s32 %s8, 1
      %s168 = smul.u32 2, %s20
      %p169 = scmp.lt.s32.totalorder %s18, 1
      %s170 = scalar_select %p169, %s18, 1
      %p171 = scmp.lt.s32.totalorder %s19, 0
      %s172 = scalar_select %p171, %s19, 0
      %p173 = scmp.lt.s32.totalorder %s168, 1
      %s174 = scalar_select %p173, %s168, 1
      %s175 = smul.addr %s172, 2
      %s176 = sadd.s32 %s174, %s175
      %s177 = smul.addr %s170, 2
      %s178 = sadd.s32 %s176, %s177
      %s179 = smul.addr %s178, 4
      %s180 = scalar_lea.vmem %s0, %s179
      %p181 = pneg %p57
      %p182 = pneg %p54
      %p183 = scmp.lt.s32.totalorder %s18, 1
      %s184 = scalar_select %p183, %s18, 1
      %p185 = scmp.lt.s32.totalorder %s19, 0
      %s186 = scalar_select %p185, %s19, 0
      %s187 = sadd.s32 %s186, %s184
      %s188 = smul.addr %s187, 4
      %s189 = scalar_lea.vmem %s1, %s188
      %p190 = pneg %p85
      %p191 = pneg %p82
      %p192 = pneg %p115
      %p193 = pneg %p112
      %s194 = smul.u32 2, %s20
      %p195 = scmp.lt.s32.totalorder %s18, 1
      %s196 = scalar_select %p195, %s18, 1
      %p197 = scmp.lt.s32.totalorder %s19, 0
      %s198 = scalar_select %p197, %s19, 0
      %p199 = scmp.lt.s32.totalorder %s194, 1
      %s200 = scalar_select %p199, %s194, 1
      %s201 = smul.addr %s198, 2
      %s202 = sadd.s32 %s200, %s201
      %s203 = smul.addr %s196, 2
      %s204 = sadd.s32 %s202, %s203
      %s205 = smul.addr %s204, 4
      %s206 = scalar_lea.vmem %s2, %s205
      %s207 = smul.u32 2, %s20
      %p208 = scmp.lt.s32.totalorder %s18, 1
      %s209 = scalar_select %p208, %s18, 1
      %p210 = scmp.lt.s32.totalorder %s19, 0
      %s211 = scalar_select %p210, %s19, 0
      %p212 = scmp.lt.s32.totalorder %s207, 1
      %s213 = scalar_select %p212, %s207, 1
      %s214 = smul.addr %s211, 2
      %s215 = sadd.s32 %s213, %s214
      %s216 = smul.addr %s209, 2
      %s217 = sadd.s32 %s215, %s216
      %s218 = smul.addr %s217, 4
      %s219 = scalar_lea.vmem %s0, %s218
      %s220 = smul.u32 2, %s20
      %p221 = scmp.lt.s32.totalorder %s18, 1
      %s222 = scalar_select %p221, %s18, 1
      %p223 = scmp.lt.s32.totalorder %s19, 0
      %s224 = scalar_select %p223, %s19, 0
      %s225 = sadd.s32 %s224, %s222
      %s226 = smul.addr %s225, 4
      %s227 = scalar_lea.vmem %s1, %s226
      %s228 = smul.u32 2, %s20
      %p229 = scmp.lt.s32.totalorder %s18, 1
      %s230 = scalar_select %p229, %s18, 1
      %p231 = scmp.lt.s32.totalorder %s19, 0
      %s232 = scalar_select %p231, %s19, 0
      %p233 = scmp.lt.s32.totalorder %s228, 1
      %s234 = scalar_select %p233, %s228, 1
      %s235 = smul.addr %s232, 2
      %s236 = sadd.s32 %s234, %s235
      %s237 = smul.addr %s230, 2
      %s238 = sadd.s32 %s236, %s237
      %s239 = smul.addr %s238, 4
      %s240 = scalar_lea.vmem %s2, %s239
      %s241 = smul.u32 2, %s20
      %v242 = vld [vmem:[%s227] sm:$0xf]
      %v243 = vld [vmem:[%s219] sm:$0xff]
      %245 = vset.pattern.permute.xlu0 0
      %246 = vperm.xlu0 %245, %v242
      %v247 = vpop.permute.xlu0 %246
      %v249 = vunpack.c.l.s4 839922192
      %v250 = vunpack.c.0.s8 %v249
      %v251 = vlaneseq
      %v252 = vshrl.u32 %v251, 7
      %v253 = vsub.s32 %v250, %v252
      %v254 = vrot.slane %v247, %v253
      %v256 = vmul.f32 %v243, %v254
      %257 = vset.pattern.permute.xlu0 1
      %258 = vperm.xlu0 %257, %v242
      %v259 = vpop.permute.xlu0 %258
      %v261 = vunpack.c.l.s4 839922192
      %v262 = vunpack.c.0.s8 %v261
      %v263 = vlaneseq
      %v264 = vshrl.u32 %v263, 7
      %v265 = vsub.s32 %v262, %v264
      %v266 = vrot.slane %v259, %v265
      %v268 = vadd.f32 %v256, %v266
      %269 = vst [vmem:[%s240] sm:$0xff] %v268
      %s270 = smul.u32 2, %s20
      %p271 = scmp.lt.s32.totalorder %s18, 1
      %s272 = scalar_select %p271, %s18, 1
      %p273 = scmp.lt.s32.totalorder %s19, 0
      %s274 = scalar_select %p273, %s19, 0
      %p275 = scmp.lt.s32.totalorder %s270, 1
      %s276 = scalar_select %p275, %s270, 1
      %s277 = smul.addr %s274, 2
      %s278 = sadd.s32 %s276, %s277
      %s279 = smul.addr %s272, 2
      %s280 = sadd.s32 %s278, %s279
      %s281 = smul.addr %s280, 4
      %s282 = scalar_lea.vmem %s2, %s281
      // Predicated region
      $region29: #{branch_1_fun.3} parent=27 // pred_check
        %p283 = pneg %p112
      $region30: #{branch_1_fun.3} parent=27 // pred_check_branch
        %285 = sbr.rel (%p283) target = $region32
      $region31: #{branch_1_fun.3} parent=27 // pred_region
        %s286 = smul.u32 2, %s20
      $region32: #{branch_1_fun.3} parent=27 // pred_fallthru
        _
    $region28: #{branch_1_fun.3} parent=5 // pred_fallthru
      _
    %p287 = scmp.le.s32.totalorder 2, %s8
    // Predicated region
    $region33: #{branch_1_fun.3} parent=5 // pred_check
      %p288 = pneg %p287
    $region34: #{branch_1_fun.3} parent=5 // pred_check_branch
      %290 = sbr.rel (%p288) target = $region36
    $region35: #{branch_1_fun.3} parent=5 // pred_region
      %s291 = ssub.s32 %s8, 2
      // Predicated region
      $region37: #{branch_1_fun.3} parent=35 // pred_check
        %p292 = pneg %p118
      $region38: #{branch_1_fun.3} parent=35 // pred_check_branch
        %294 = sbr.rel (%p292) target = $region40
      $region39: #{branch_1_fun.3} parent=35 // pred_region
        %s295 = smul.u32 2, %s23
        %p296 = scmp.lt.s32.totalorder %s21, 1
        %s297 = scalar_select %p296, %s21, 1
        %p298 = scmp.lt.s32.totalorder %s22, 0
        %s299 = scalar_select %p298, %s22, 0
        %p300 = scmp.lt.s32.totalorder %s295, 1
        %s301 = scalar_select %p300, %s295, 1
        %s302 = smul.addr %s299, 2
        %s303 = sadd.s32 %s301, %s302
        %s304 = smul.addr %s297, 2
        %s305 = sadd.s32 %s303, %s304
        %s306 = smul.addr %s305, 4
        %s307 = scalar_lea.vmem %s2, %s306
      $region40: #{branch_1_fun.3} parent=35 // pred_fallthru
        _
    $region36: #{branch_1_fun.3} parent=5 // pred_fallthru
      _
  $region6: #{branch_1_fun.3} parent=0 // loop_footer
    %s12 = sadd.s32 1, %s8
  $region7: #{branch_1_fun.3} parent=0 // loop_footer_branch
    %7 = sbr.rel target = $region3
  $region8: #{branch_1_fun.3} parent=0 // loop_exit
    _

// kernel: branch_1_fun.2
$region0: #{branch_1_fun.2}
  #allocation0 [shape = 'u32[]', space=smem, size = 0x4, offset = 0x4, fixed_abs, tag = 'smem constant byte address 0x4 - core index']
  #allocation1 [shape = 'u32[144,128]{1,0:T(1,128)}', space=vmem, size = 0x12000, scoped, tag = 'internal scratch']
  #allocation2 [shape = 'f32[4,256]{1,0:T(4,128)}', space=vmem, size = 0x1000, scoped, tag = 'scratch operand']
  #allocation3 [shape = 'f32[4,256]{1,0:T(4,128)}', space=vmem, size = 0x1000, scoped, tag = 'scratch operand']
  %s0 = inlined_call_operand.vmem [shape: f32[2,4,256], index: 0, kind: input, shape index: {}]
  %s1 = inlined_call_operand.vmem [shape: f32[2,4,1], index: 1, kind: output, shape index: {0}]
  %s2 = inlined_call_operand.vmem [shape: f32[2,4,1], index: 2, kind: output, shape index: {1}]
  %3 = xla_tuple %s1, %s2
  %s4 = sld [smem:[#allocation0]]
  $region53: #{branch_1_fun.2} parent=0
    _
  %s6 = ssub.s32 1, %s4
  %s7 = scalar_select 0, %s6, %s4
  loop: start=0, step=1, limit=4
  $region2: #{branch_1_fun.2} parent=0 // loop_pre_header
    _
  $region3: #{branch_1_fun.2} parent=0 // loop_header
    %s9 = sphi 0, %s13
    %p10 = scmp.ge.s32.totalorder %s9, 4
    %s16 = sphi 0, %s35
    %s17 = sphi 0, %s31
    %s18 = sphi 0, %s27
    %s19 = sphi 0, %s16
    %s20 = sphi 0, %s17
    %s21 = sphi 0, %s18
    %s22 = sphi 0, %s19
    %s23 = sphi 0, %s20
    %s24 = sphi 0, %s21
    %s42 = sphi 0, %s44
    %s45 = sphi 0, %s42
    %s46 = sphi 0, %s45
    %s62 = sphi 0, %s46
    %s70 = sphi 0, %s72
    %s73 = sphi 0, %s70
    %s74 = sphi 0, %s73
    %s90 = sphi 0, %s74
    %s98 = sphi 0, %s100
    %s101 = sphi 0, %s98
    %s102 = sphi 0, %s101
    %s118 = sphi 0, %s102
  $region4: #{branch_1_fun.2} parent=0 // loop_header_branch
    %12 = sbr.rel (%p10) target = $region8
  $region5: #{branch_1_fun.2} parent=0 // loop_body
    %s14 = ssub.s32 %s9, 1
    %s15 = ssub.s32 %s9, 2
    %s25 = sadd.s32 1, %s18
    %p26 = scmp.ge.s32.totalorder %s25, 1
    %s27 = scalar_select %p26, 0, %s25
    %s28 = sadd.s32 1, %s17
    %s29 = scalar_select %p26, %s28, %s17
    %p30 = scmp.ge.s32.totalorder %s29, 1
    %s31 = scalar_select %p30, 0, %s29
    %s32 = sadd.s32 1, %s16
    %s33 = scalar_select %p30, %s32, %s16
    %p34 = scmp.ge.s32.totalorder %s33, 2
    %s35 = scalar_select %p34, 0, %s33
    %s36 = ssub.s32 %s16, %s35
    %s37 = ssub.s32 %s17, %s31
    %s38 = sor.u32 %s36, %s37
    %s39 = ssub.s32 %s18, %s27
    %s40 = sor.u32 %s38, %s39
    %p41 = scmp.eq.s32.totalorder %s40, 0
    %s43 = sadd.s32 %s42, 1
    %s44 = scalar_select %p41, %s42, %s43
    %p47 = pneg %p41
    %p48 = scmp.eq.s32.totalorder %s9, 1
    %p49 = por %p47, %p48
    %p50 = scmp.ne.s32.totalorder %s42, %s45
    %p51 = scmp.eq.s32.totalorder %s9, 0
    %p52 = por %p50, %p51
    %p53 = scmp.ne.s32.totalorder %s42, %s45
    %p54 = scmp.eq.s32.totalorder %s14, 1
    %p55 = por %p53, %p54
    %p56 = scmp.ne.s32.totalorder %s45, %s46
    %p57 = scmp.eq.s32.totalorder %s14, 0
    %p58 = por %p56, %p57
    %p59 = scmp.ne.s32.totalorder %s45, %s46
    %p60 = scmp.eq.s32.totalorder %s15, 1
    %p61 = por %p59, %p60
    %p63 = scmp.ne.s32.totalorder %s46, %s62
    %p64 = scmp.eq.s32.totalorder %s15, 0
    %p65 = por %p63, %p64
    %s66 = ssub.s32 %s16, %s35
    %s67 = ssub.s32 %s17, %s31
    %s68 = sor.u32 %s66, %s67
    %p69 = scmp.eq.s32.totalorder %s68, 0
    %s71 = sadd.s32 %s70, 1
    %s72 = scalar_select %p69, %s70, %s71
    %p75 = pneg %p69
    %p76 = scmp.eq.s32.totalorder %s9, 1
    %p77 = por %p75, %p76
    %p78 = scmp.ne.s32.totalorder %s70, %s73
    %p79 = scmp.eq.s32.totalorder %s9, 0
    %p80 = por %p78, %p79
    %p81 = scmp.ne.s32.totalorder %s70, %s73
    %p82 = scmp.eq.s32.totalorder %s14, 1
    %p83 = por %p81, %p82
    %p84 = scmp.ne.s32.totalorder %s73, %s74
    %p85 = scmp.eq.s32.totalorder %s14, 0
    %p86 = por %p84, %p85
    %p87 = scmp.ne.s32.totalorder %s73, %s74
    %p88 = scmp.eq.s32.totalorder %s15, 1
    %p89 = por %p87, %p88
    %p91 = scmp.ne.s32.totalorder %s74, %s90
    %p92 = scmp.eq.s32.totalorder %s15, 0
    %p93 = por %p91, %p92
    %s94 = ssub.s32 %s16, %s35
    %s95 = ssub.s32 %s17, %s31
    %s96 = sor.u32 %s94, %s95
    %p97 = scmp.eq.s32.totalorder %s96, 0
    %s99 = sadd.s32 %s98, 1
    %s100 = scalar_select %p97, %s98, %s99
    %p103 = pneg %p97
    %p104 = scmp.eq.s32.totalorder %s9, 1
    %p105 = por %p103, %p104
    %p106 = scmp.ne.s32.totalorder %s98, %s101
    %p107 = scmp.eq.s32.totalorder %s9, 0
    %p108 = por %p106, %p107
    %p109 = scmp.ne.s32.totalorder %s98, %s101
    %p110 = scmp.eq.s32.totalorder %s14, 1
    %p111 = por %p109, %p110
    %p112 = scmp.ne.s32.totalorder %s101, %s102
    %p113 = scmp.eq.s32.totalorder %s14, 0
    %p114 = por %p112, %p113
    %p115 = scmp.ne.s32.totalorder %s101, %s102
    %p116 = scmp.eq.s32.totalorder %s15, 1
    %p117 = por %p115, %p116
    %p119 = scmp.ne.s32.totalorder %s102, %s118
    %p120 = scmp.eq.s32.totalorder %s15, 0
    %p121 = por %p119, %p120
    %p122 = scmp.le.s32.totalorder 1, %s9
    %p123 = scmp.lt.s32.totalorder %s9, 3
    %p124 = pnand %p122, %p123
    %p125 = pneg %p124
    // Predicated region
    $region9: #{branch_1_fun.2} parent=5 // pred_check
      _
    $region10: #{branch_1_fun.2} parent=5 // pred_check_branch
      %127 = sbr.rel (%p124) target = $region12
    $region11: #{branch_1_fun.2} parent=5 // pred_region
      %s128 = ssub.s32 %s9, 1
    $region12: #{branch_1_fun.2} parent=5 // pred_fallthru
      _
    %p129 = scmp.lt.s32.totalorder %s9, 2
    // Predicated region
    $region13: #{branch_1_fun.2} parent=5 // pred_check
      %p130 = pneg %p129
    $region14: #{branch_1_fun.2} parent=5 // pred_check_branch
      %132 = sbr.rel (%p130) target = $region16
    $region15: #{branch_1_fun.2} parent=5 // pred_region
      // Predicated region
      $region17: #{branch_1_fun.2} parent=15 // pred_check
        %p133 = pneg %p52
      $region18: #{branch_1_fun.2} parent=15 // pred_check_branch
        %135 = sbr.rel (%p133) target = $region20
      $region19: #{branch_1_fun.2} parent=15 // pred_region
        %s136 = smul.u32 2, %s18
        %p137 = scmp.lt.s32.totalorder %s16, 1
        %s138 = scalar_select %p137, %s16, 1
        %p139 = scmp.lt.s32.totalorder %s17, 0
        %s140 = scalar_select %p139, %s17, 0
        %p141 = scmp.lt.s32.totalorder %s136, 1
        %s142 = scalar_select %p141, %s136, 1
        %s143 = smul.addr %s140, 2
        %s144 = sadd.s32 %s142, %s143
        %s145 = smul.addr %s138, 2
        %s146 = sadd.s32 %s144, %s145
        %s147 = smul.addr %s146, 4
        %s148 = scalar_lea.vmem %s0, %s147
        %s149 = smul.u32 2, %s18
      $region20: #{branch_1_fun.2} parent=15 // pred_fallthru
        _
    $region16: #{branch_1_fun.2} parent=5 // pred_fallthru
      _
    %p150 = scmp.le.s32.totalorder 1, %s9
    %p151 = scmp.lt.s32.totalorder %s9, 3
    %p152 = pnand %p150, %p151
    %p153 = pneg %p152
    // Predicated region
    $region21: #{branch_1_fun.2} parent=5 // pred_check
      _
    $region22: #{branch_1_fun.2} parent=5 // pred_check_branch
      %155 = sbr.rel (%p152) target = $region24
    $region23: #{branch_1_fun.2} parent=5 // pred_region
      %s156 = ssub.s32 %s9, 1
      %s157 = smul.u32 2, %s21
      %p158 = scmp.lt.s32.totalorder %s19, 1
      %s159 = scalar_select %p158, %s19, 1
      %p160 = scmp.lt.s32.totalorder %s20, 0
      %s161 = scalar_select %p160, %s20, 0
      %p162 = scmp.lt.s32.totalorder %s157, 1
      %s163 = scalar_select %p162, %s157, 1
      %s164 = smul.addr %s161, 2
      %s165 = sadd.s32 %s163, %s164
      %s166 = smul.addr %s159, 2
      %s167 = sadd.s32 %s165, %s166
      %s168 = smul.addr %s167, 4
      %s169 = scalar_lea.vmem %s0, %s168
      %p170 = pneg %p58
      %p171 = pneg %p55
      %p172 = pneg %p86
      %p173 = pneg %p83
      %p174 = scmp.lt.s32.totalorder %s19, 1
      %s175 = scalar_select %p174, %s19, 1
      %p176 = scmp.lt.s32.totalorder %s20, 0
      %s177 = scalar_select %p176, %s20, 0
      %s178 = sadd.s32 %s177, %s175
      %s179 = smul.addr %s178, 4
      %s180 = scalar_lea.vmem %s1, %s179
      %p181 = pneg %p114
      %p182 = pneg %p111
      %p183 = scmp.lt.s32.totalorder %s19, 1
      %s184 = scalar_select %p183, %s19, 1
      %p185 = scmp.lt.s32.totalorder %s20, 0
      %s186 = scalar_select %p185, %s20, 0
      %s187 = sadd.s32 %s186, %s184
      %s188 = smul.addr %s187, 4
      %s189 = scalar_lea.vmem %s2, %s188
      %s190 = smul.u32 2, %s21
      %p191 = scmp.lt.s32.totalorder %s19, 1
      %s192 = scalar_select %p191, %s19, 1
      %p193 = scmp.lt.s32.totalorder %s20, 0
      %s194 = scalar_select %p193, %s20, 0
      %p195 = scmp.lt.s32.totalorder %s190, 1
      %s196 = scalar_select %p195, %s190, 1
      %s197 = smul.addr %s194, 2
      %s198 = sadd.s32 %s196, %s197
      %s199 = smul.addr %s192, 2
      %s200 = sadd.s32 %s198, %s199
      %s201 = smul.addr %s200, 4
      %s202 = scalar_lea.vmem %s0, %s201
      %s203 = smul.u32 2, %s21
      %p204 = scmp.lt.s32.totalorder %s19, 1
      %s205 = scalar_select %p204, %s19, 1
      %p206 = scmp.lt.s32.totalorder %s20, 0
      %s207 = scalar_select %p206, %s20, 0
      %s208 = sadd.s32 %s207, %s205
      %s209 = smul.addr %s208, 4
      %s210 = scalar_lea.vmem %s1, %s209
      %p211 = scmp.lt.s32.totalorder %s19, 1
      %s212 = scalar_select %p211, %s19, 1
      %p213 = scmp.lt.s32.totalorder %s20, 0
      %s214 = scalar_select %p213, %s20, 0
      %s215 = sadd.s32 %s214, %s212
      %s216 = smul.addr %s215, 4
      %s217 = scalar_lea.vmem %s2, %s216
      %p218 = scmp.eq.s32.totalorder %s21, 0
      // Predicated region
      $region25: #{branch_1_fun.2} parent=23 // pred_check
        %p219 = pneg %p218
      $region26: #{branch_1_fun.2} parent=23 // pred_check_branch
        %221 = sbr.rel (%p219) target = $region28
      $region27: #{branch_1_fun.2} parent=23 // pred_region
        %222 = vst [vmem:[#allocation2] sm:$0xff] 0.0
        %223 = vst [vmem:[#allocation3] sm:$0xff] 0.0
      $region28: #{branch_1_fun.2} parent=23 // pred_fallthru
        _
      %v224 = vld [vmem:[%s202] sm:$0xff]
      %v225 = vld [vmem:[#allocation2] sm:$0xff]
      %v226 = vadd.f32 %v225, %v224
      %227 = vst [vmem:[#allocation2] sm:$0xff] %v226
      %v228 = vld [vmem:[#allocation3] sm:$0xff]
      %v229 = vmul.f32 %v224, %v224
      %v230 = vadd.f32 %v228, %v229
      %231 = vst [vmem:[#allocation3] sm:$0xff] %v230
      // Predicated region
      $region29: #{branch_1_fun.2} parent=23 // pred_check
        %p232 = pneg %p218
      $region30: #{branch_1_fun.2} parent=23 // pred_check_branch
        %234 = sbr.rel (%p232) target = $region32
      $region31: #{branch_1_fun.2} parent=23 // pred_region
        %v235 = vld [vmem:[#allocation2] sm:$0xff]
        %v237 = vcombine.high %v235, %v235
        %vm239 = vcmask 1043456
        %v240 = vsel %vm239, %v235, 0.0
        %v241 = vsel %vm239, %v237, 0.0
        %v242 = vadd.f32 %v240, %v241
        %243 = vadd.xlane.f32.xlu0 %v242
        %v244 = vpop.xlane.xlu0 %243
        %v245 = vld [vmem:[#allocation3] sm:$0xff]
        %v247 = vcombine.high %v245, %v245
        %v249 = vsel %vm239, %v245, 0.0
        %v250 = vsel %vm239, %v247, 0.0
        %v251 = vadd.f32 %v249, %v250
        %252 = vadd.xlane.f32.xlu0 %v251
        %v253 = vpop.xlane.xlu0 %252
        %v254 = vmul.f32 %v244, 0.00390625
        %v255 = vmul.f32 %v253, 0.00390625
        %v256 = vmul.f32 %v254, %v254
        %v257 = vsub.f32 %v255, %v256
        %v258 = vmax.f32 %v257, 0.0
        %vm259 = vcmask 3072
        %260 = vst.msk [vmem:[%s210] sm:$0xf] %vm259, %v254
        %v261 = vadd.f32 %v258, 1e-06
        %v262 = vrsqrt.pop %v261
        %v263 = vmul.f32 %v261, %v262
        %vm264 = vcmp.eq.f32.partialorder %v261, inf
        %v265 = vsel %vm264, %v261, %v263
        %vm266 = vcmp.eq.f32.partialorder %v261, 0.0
        %v267 = vand.u32 %v261, 2147483648
        %v268 = vsel %vm266, %v267, %v265
        %269 = vst.msk [vmem:[%s217] sm:$0xf] %vm259, %v268
      $region32: #{branch_1_fun.2} parent=23 // pred_fallthru
        _
      %p270 = scmp.lt.s32.totalorder %s19, 1
      %s271 = scalar_select %p270, %s19, 1
      %p272 = scmp.lt.s32.totalorder %s20, 0
      %s273 = scalar_select %p272, %s20, 0
      %s274 = sadd.s32 %s273, %s271
      %s275 = smul.addr %s274, 4
      %s276 = scalar_lea.vmem %s1, %s275
      %p277 = scmp.lt.s32.totalorder %s19, 1
      %s278 = scalar_select %p277, %s19, 1
      %p279 = scmp.lt.s32.totalorder %s20, 0
      %s280 = scalar_select %p279, %s20, 0
      %s281 = sadd.s32 %s280, %s278
      %s282 = smul.addr %s281, 4
      %s283 = scalar_lea.vmem %s2, %s282
      // Predicated region
      $region33: #{branch_1_fun.2} parent=23 // pred_check
        %p284 = pneg %p83
      $region34: #{branch_1_fun.2} parent=23 // pred_check_branch
        %286 = sbr.rel (%p284) target = $region36
      $region35: #{branch_1_fun.2} parent=23 // pred_region
        _
      $region36: #{branch_1_fun.2} parent=23 // pred_fallthru
        _
      // Predicated region
      $region37: #{branch_1_fun.2} parent=23 // pred_check
        %p287 = pneg %p111
      $region38: #{branch_1_fun.2} parent=23 // pred_check_branch
        %289 = sbr.rel (%p287) target = $region40
      $region39: #{branch_1_fun.2} parent=23 // pred_region
        _
      $region40: #{branch_1_fun.2} parent=23 // pred_fallthru
        _
    $region24: #{branch_1_fun.2} parent=5 // pred_fallthru
      _
    %p290 = scmp.le.s32.totalorder 2, %s9
    // Predicated region
    $region41: #{branch_1_fun.2} parent=5 // pred_check
      %p291 = pneg %p290
    $region42: #{branch_1_fun.2} parent=5 // pred_check_branch
      %293 = sbr.rel (%p291) target = $region44
    $region43: #{branch_1_fun.2} parent=5 // pred_region
      %s294 = ssub.s32 %s9, 2
      // Predicated region
      $region45: #{branch_1_fun.2} parent=43 // pred_check
        %p295 = pneg %p89
      $region46: #{branch_1_fun.2} parent=43 // pred_check_branch
        %297 = sbr.rel (%p295) target = $region48
      $region47: #{branch_1_fun.2} parent=43 // pred_region
        %p298 = scmp.lt.s32.totalorder %s22, 1
        %s299 = scalar_select %p298, %s22, 1
        %p300 = scmp.lt.s32.totalorder %s23, 0
        %s301 = scalar_select %p300, %s23, 0
        %s302 = sadd.s32 %s301, %s299
        %s303 = smul.addr %s302, 4
        %s304 = scalar_lea.vmem %s1, %s303
      $region48: #{branch_1_fun.2} parent=43 // pred_fallthru
        _
      // Predicated region
      $region49: #{branch_1_fun.2} parent=43 // pred_check
        %p305 = pneg %p117
      $region50: #{branch_1_fun.2} parent=43 // pred_check_branch
        %307 = sbr.rel (%p305) target = $region52
      $region51: #{branch_1_fun.2} parent=43 // pred_region
        %p308 = scmp.lt.s32.totalorder %s22, 1
        %s309 = scalar_select %p308, %s22, 1
        %p310 = scmp.lt.s32.totalorder %s23, 0
        %s311 = scalar_select %p310, %s23, 0
        %s312 = sadd.s32 %s311, %s309
        %s313 = smul.addr %s312, 4
        %s314 = scalar_lea.vmem %s2, %s313
      $region52: #{branch_1_fun.2} parent=43 // pred_fallthru
        _
    $region44: #{branch_1_fun.2} parent=5 // pred_fallthru
      _
  $region6: #{branch_1_fun.2} parent=0 // loop_footer
    %s13 = sadd.s32 1, %s9
  $region7: #{branch_1_fun.2} parent=0 // loop_footer_branch
    %8 = sbr.rel target = $region3
  $region8: #{branch_1_fun.2} parent=0 // loop_exit
    _

</llo_original>
